<compile_context>
chip_gen: v7x
topology: tpu7x:2x2x1
jax: 0.10.0
libtpu: 0.0.40
codegen_flags: <defaults>
</compile_context>

<pallas_src>
import math

import jax
import jax.numpy as jnp
from jax.experimental import pallas as pl
from jax.experimental.pallas import tpu as pltpu  # noqa: F401 (see TODO above)


# ----------------------------------------------------------------------------
# Fused Pallas kernel: one invocation, whole problem resident in VMEM
# ----------------------------------------------------------------------------

def _fused_model_kernel(x_ref, ctx_ref, qb_ref, ob_ref,
                        w_qinT_ref, wk_ref, wv_ref, w_ooT_ref, w_oinT_ref,
                        o_ref):
    f32 = jnp.float32
    mm = jnp.bfloat16                      # MXU operand dtype

    B = x_ref.shape[0]
    S = ctx_ref.shape[0] // B

    # -- batch-folded K / V projections: one (B*S, Dc) x (Dc, D) matmul each ----
    ctx = ctx_ref[...]                                                    # (B*S, Dc) bf16
    k_all = jnp.dot(ctx, wk_ref[...], preferred_element_type=f32).astype(mm)   # (B*S, D)
    v_all = jnp.dot(ctx, wv_ref[...], preferred_element_type=f32).astype(mm)   # (B*S, D)

    # -- fully-unrolled per-batch attention + fused in/out projections ---------
    for b in range(B):                      # B is tiny and static: unrolled at trace time
        xb = x_ref[b]                       # (C, HW) f32, kept for the UNet skip
        xb_mm = xb.astype(mm)

        # q directly from x via the pre-fused (Wq^T W_in^T)/sqrt(D); the bias
        # column already carries b_in, the time embedding and the 1/sqrt(D) scale.
        qT = jnp.dot(w_qinT_ref[...], xb_mm,
                     preferred_element_type=f32) + qb_ref[b]              # (D, HW)

        k = k_all[b * S:(b + 1) * S, :]     # (S, D)  static, sublane-aligned slices
        v = v_all[b * S:(b + 1) * S, :]     # (S, D)

        s = jnp.dot(k, qT.astype(mm), preferred_element_type=f32)         # (S, HW)
        s = s - jnp.max(s, axis=0, keepdims=True)       # softmax over S (sublanes)
        p = jnp.exp(s)
        p = p * pl.reciprocal(jnp.sum(p, axis=0, keepdims=True), approx=True)

        # aT = V^T P  (contract the S axis)
        aT = jax.lax.dot_general(v, p.astype(mm),
                                 (((0,), (0,)), ((), ())),
                                 preferred_element_type=f32)              # (D, HW)

        # out = (W_out^T W_in^T) x + (W_out^T Wo^T) aT + bias + x  (lane-dense store)
        out = jnp.dot(w_oinT_ref[...], xb_mm, preferred_element_type=f32)  # (C, HW)
        out = out + jnp.dot(w_ooT_ref[...], aT.astype(mm),
                            preferred_element_type=f32)
        out = out + ob_ref[b] + xb
        o_ref[b] = out.astype(o_ref.dtype)


# ----------------------------------------------------------------------------
# JAX glue (tiny per-step scalar/vector work left to XLA)
# ----------------------------------------------------------------------------

def _timestep_embedding(t, dim):
    half = dim // 2
    freqs = jnp.exp(-math.log(10000.0) * jnp.arange(half, dtype=jnp.float32) / half)
    args = t.astype(jnp.float32)[:, None] * freqs[None, :]
    return jnp.concatenate([jnp.cos(args), jnp.sin(args)], axis=-1)      # (B, dim)


def _time_mlp(t, prepped):
    # (B,32)x(32,64) + (B,64)x(64,64): launch overhead of a standalone pallas_call
    # exceeds the compute, so it stays in XLA (perf review).
    emb = _timestep_embedding(t, prepped['t_w1'].shape[0])
    h = emb @ prepped['t_w1'] + prepped['t_b1']
    h = h * jax.nn.sigmoid(h)                                            # SiLU
    return h @ prepped['t_w2'] + prepped['t_b2']                         # (B, D)


def _prepare_weights(params):
    """One-time weight plumbing, hoisted out of the per-step forward."""
    mm = jnp.bfloat16
    D = params['wq'].shape[0]
    inv_sqrt_d = 1.0 / math.sqrt(D)

    # Algebraic pre-fusion (no norm/nonlinearity between these projections):
    #   qT  = (Wq^T W_in^T)/sqrt(D) x + Wq^T(b_in + temb)/sqrt(D)
    #   out = (W_out^T W_in^T) x + (W_out^T Wo^T) aT + W_out^T(b_in + temb) + b_out + x
    w_qinT = (params['w_in'] @ params['wq']).T * inv_sqrt_d              # (D, C)
    w_oinT = (params['w_in'] @ params['w_out']).T                        # (C, C)
    w_ooT = (params['wo'] @ params['w_out']).T                           # (C, D)

    return {
        # bf16 MXU operands, built once
        'w_qinT': w_qinT.astype(mm),
        'w_oinT': w_oinT.astype(mm),
        'w_ooT':  w_ooT.astype(mm),
        'wk': params['wk'].astype(mm),                                   # (Dc, D)
        'wv': params['wv'].astype(mm),                                   # (Dc, D)
        # f32 pieces for the per-step bias / timestep path (XLA)
        'wq_scaled': params['wq'] * inv_sqrt_d,                          # (D, D)
        'w_out': params['w_out'],                                        # (D, C)
        'b_in': params['b_in'],                                          # (1, D)
        'b_out': params['b_out'],                                        # (1, C)
        't_w1': params['t_w1'], 't_b1': params['t_b1'],
        't_w2': params['t_w2'], 't_b2': params['t_b2'],
    }


def _forward_crossattn(x_nchw, t, context, prepped):
    """Synthetic UNet stand-in forward (crossattn conditioning)."""
    B, C, H, W = x_nchw.shape
    HW = H * W
    _, S, Dc = context.shape
    mm = jnp.bfloat16

    # NCHW -> (B, C, HW): pure reshape (no transpose), HW on the lane axis.
    x_tok = x_nchw.reshape(B, C, HW)
    # Context is only ever an MXU operand: pre-cast to bf16, batch-fold rows.
    ctx2d = context.reshape(B * S, Dc).astype(mm)

    # Per-step bias columns (b_in folded into the time-embedding path, 1/sqrt(D)
    # folded into the q path).
    temb = _time_mlp(t, prepped)                                         # (B, D)
    bcol = prepped['b_in'] + temb                                        # (B, D)
    q_bias = (bcol @ prepped['wq_scaled'])[:, :, None]                   # (B, D, 1)
    out_bias = (bcol @ prepped['w_out'] + prepped['b_out'])[:, :, None]  # (B, C, 1)

    # Single grid step: all operands fit in VMEM at these shapes, so the whole
    # arrays are passed (no grid / BlockSpecs -> whole-array VMEM blocks).
    # TODO(synk): at realistic LDM sizes (HW~4096, D>=320, S~77) add a "parallel"
    # HW tile axis (and a "parallel" batch axis on v7x), raise vmem_limit_bytes,
    # and mark the constant weight specs pl.Buffered(1).
    out_tok = pl.pallas_call(
        _fused_model_kernel,
        out_shape=jax.ShapeDtypeStruct((B, C, HW), jnp.float32),
    )(x_tok, ctx2d, q_bias, out_bias,
      prepped['w_qinT'], prepped['wk'], prepped['wv'],
      prepped['w_ooT'], prepped['w_oinT'])

    # (B, C, HW) == flattened NCHW: plain reshape back, no transpose.
    return out_tok.reshape(B, C, H, W)


class DiffusionWrapper:
    """JAX/Pallas port of refnet.ldm.ddpm.DiffusionWrapper (crossattn path)."""

    def __init__(self, params, conditioning_key='crossattn',
                 sequential_cross_attn=False):
        assert conditioning_key in [None, 'concat', 'crossattn', 'hybrid',
                                    'adm', 'hybrid-adm', 'crossattn-adm']
        self.conditioning_key = conditioning_key
        self.sequential_cross_attn = sequential_cross_attn
        # Weight layout plumbing done once at init (this forward runs hundreds
        # of times per sampled image).
        self.prepped = _prepare_weights(params)
        self._fwd = jax.jit(_forward_crossattn)

    def __call__(self, x, t, c_concat=None, c_crossattn=None, c_adm=None,
                 injects=None):
        if self.conditioning_key == 'crossattn':
            if not self.sequential_cross_attn:
                cc = jnp.concatenate(c_crossattn, axis=1)   # torch.cat(c_crossattn, 1)
            else:
                # TODO(synk): sequential cross-attn needs per-context attention in
                # the wrapped model; only the concatenated path is implemented.
                raise NotImplementedError
            return self._fwd(x, t, cc, self.prepped)
        elif self.conditioning_key is None:
            # TODO(synk): unconditional path would need a context-free stand-in model.
            raise NotImplementedError
        else:
            # TODO(synk): 'concat'/'hybrid'/'adm' variants change the wrapped UNet's
            # input-channel / class-embedding shapes; only 'crossattn' is implemented.
            raise NotImplementedError


def make_params(key, C=4, D=64, Dc=32, Demb=32):
    ks = jax.random.split(key, 10)
    s = 0.05
    return {
        't_w1':  s * jax.random.normal(ks[0], (Demb, D), jnp.float32),
        't_b1':  jnp.zeros((1, D), jnp.float32),
        't_w2':  s * jax.random.normal(ks[1], (D, D), jnp.float32),
        't_b2':  jnp.zeros((1, D), jnp.float32),
        'w_in':  s * jax.random.normal(ks[2], (C, D), jnp.float32),
        'b_in':  jnp.zeros((1, D), jnp.float32),
        'wq':    s * jax.random.normal(ks[3], (D, D), jnp.float32),
        'wk':    s * jax.random.normal(ks[4], (Dc, D), jnp.float32),
        'wv':    s * jax.random.normal(ks[5], (Dc, D), jnp.float32),
        'wo':    s * jax.random.normal(ks[6], (D, D), jnp.float32),
        'w_out': s * jax.random.normal(ks[7], (D, C), jnp.float32),
        'b_out': jnp.zeros((1, C), jnp.float32),
    }


if __name__ == "__main__":
    key = jax.random.PRNGKey(0)
    kx, kc1, kc2, kp = jax.random.split(key, 4)

    B, C, H, W = 2, 4, 16, 16      # latent x: NCHW
    S, Dc = 8, 32                  # context sequence / dim
    D, Demb = 64, 32               # model dim / timestep-embedding dim

    x = jax.random.normal(kx, (B, C, H, W), jnp.float32)
    t = jnp.array([3.0, 7.0], dtype=jnp.float32)
    # two context chunks, concatenated along dim 1 inside the wrapper
    c_crossattn = [
        jax.random.normal(kc1, (B, S // 2, Dc), jnp.float32),
        jax.random.normal(kc2, (B, S - S // 2, Dc), jnp.float32),
    ]

    params = make_params(kp, C=C, D=D, Dc=Dc, Demb=Demb)
    wrapper = DiffusionWrapper(params, conditioning_key='crossattn')

    out = wrapper(x, t, c_crossattn=c_crossattn)
    out = jax.block_until_ready(out)
    assert out.shape == (B, C, H, W) and out.dtype == jnp.float32
    assert bool(jnp.all(jnp.isfinite(out)))
    print("KERNEL_OK")
</pallas_src>

<mosaic_0001>
module attributes {stable_mosaic.version = 11 : i64} {
  func.func @_fused_model_kernel(%arg0: memref<2x4x256xf32, #tpu.memory_space<vmem>>, %arg1: memref<16x32xbf16, #tpu.memory_space<vmem>>, %arg2: memref<2x64x1xf32, #tpu.memory_space<vmem>>, %arg3: memref<2x4x1xf32, #tpu.memory_space<vmem>>, %arg4: memref<64x4xbf16, #tpu.memory_space<vmem>>, %arg5: memref<32x64xbf16, #tpu.memory_space<vmem>>, %arg6: memref<32x64xbf16, #tpu.memory_space<vmem>>, %arg7: memref<4x64xbf16, #tpu.memory_space<vmem>>, %arg8: memref<4x4xbf16, #tpu.memory_space<vmem>>, %arg9: memref<2x4x256xf32, #tpu.memory_space<vmem>>) attributes {dimension_semantics = [], scalar_prefetch = 0 : i64, scratch_operands = 0 : i64, tpu.core_type = #tpu.core_type<tc>} {
    %c0 = arith.constant 0 : index
    %c0_0 = arith.constant 0 : index
    %0 = vector.load %arg1[%c0, %c0_0] : memref<16x32xbf16, #tpu.memory_space<vmem>>, vector<16x32xbf16>
    %c0_1 = arith.constant 0 : index
    %c0_2 = arith.constant 0 : index
    %1 = vector.load %arg5[%c0_1, %c0_2] : memref<32x64xbf16, #tpu.memory_space<vmem>>, vector<32x64xbf16>
    %cst = arith.constant dense<0.000000e+00> : vector<16x64xf32>
    %2 = tpu.matmul %0, %1, %cst {dimension_numbers = #tpu.dot_dimension_numbers<[1], [0], [0], [1], [0, 0, 1, 1], [], []>} : vector<16x32xbf16>, vector<32x64xbf16>, vector<16x64xf32> -> vector<16x64xf32>
    %3 = arith.truncf %2 : vector<16x64xf32> to vector<16x64xbf16>
    %c0_3 = arith.constant 0 : index
    %c0_4 = arith.constant 0 : index
    %4 = vector.load %arg6[%c0_3, %c0_4] : memref<32x64xbf16, #tpu.memory_space<vmem>>, vector<32x64xbf16>
    %cst_5 = arith.constant dense<0.000000e+00> : vector<16x64xf32>
    %5 = tpu.matmul %0, %4, %cst_5 {dimension_numbers = #tpu.dot_dimension_numbers<[1], [0], [0], [1], [0, 0, 1, 1], [], []>} : vector<16x32xbf16>, vector<32x64xbf16>, vector<16x64xf32> -> vector<16x64xf32>
    %6 = arith.truncf %5 : vector<16x64xf32> to vector<16x64xbf16>
    %c0_6 = arith.constant 0 : index
    %c0_7 = arith.constant 0 : index
    %c0_8 = arith.constant 0 : index
    %7 = vector.load %arg0[%c0_6, %c0_7, %c0_8] : memref<2x4x256xf32, #tpu.memory_space<vmem>>, vector<1x4x256xf32>
    %8 = vector.shape_cast %7 : vector<1x4x256xf32> to vector<4x256xf32>
    %9 = arith.truncf %8 : vector<4x256xf32> to vector<4x256xbf16>
    %c0_9 = arith.constant 0 : index
    %c0_10 = arith.constant 0 : index
    %10 = vector.load %arg4[%c0_9, %c0_10] : memref<64x4xbf16, #tpu.memory_space<vmem>>, vector<64x4xbf16>
    %cst_11 = arith.constant dense<0.000000e+00> : vector<64x256xf32>
    %11 = tpu.matmul %10, %9, %cst_11 {dimension_numbers = #tpu.dot_dimension_numbers<[1], [0], [0], [1], [0, 0, 1, 1], [], []>} : vector<64x4xbf16>, vector<4x256xbf16>, vector<64x256xf32> -> vector<64x256xf32>
    %c0_12 = arith.constant 0 : index
    %c0_13 = arith.constant 0 : index
    %c0_14 = arith.constant 0 : index
    %12 = vector.load %arg2[%c0_12, %c0_13, %c0_14] : memref<2x64x1xf32, #tpu.memory_space<vmem>>, vector<1x64x1xf32>
    %13 = vector.shape_cast %12 : vector<1x64x1xf32> to vector<64x1xf32>
    %14 = vector.broadcast %13 : vector<64x1xf32> to vector<64x256xf32>
    %15 = arith.addf %11, %14 : vector<64x256xf32>
    %16 = vector.extract_strided_slice %3 {offsets = [0, 0], sizes = [8, 64], strides = [1, 1]} : vector<16x64xbf16> to vector<8x64xbf16>
    %17 = vector.extract_strided_slice %6 {offsets = [0, 0], sizes = [8, 64], strides = [1, 1]} : vector<16x64xbf16> to vector<8x64xbf16>
    %18 = arith.truncf %15 : vector<64x256xf32> to vector<64x256xbf16>
    %cst_15 = arith.constant dense<0.000000e+00> : vector<8x256xf32>
    %19 = tpu.matmul %16, %18, %cst_15 {dimension_numbers = #tpu.dot_dimension_numbers<[1], [0], [0], [1], [0, 0, 1, 1], [], []>} : vector<8x64xbf16>, vector<64x256xbf16>, vector<8x256xf32> -> vector<8x256xf32>
    %cst_16 = arith.constant dense<0xFF800000> : vector<256xf32>
    %20 = vector.multi_reduction <maximumf>, %19, %cst_16 [0] : vector<8x256xf32> to vector<256xf32>
    %21 = vector.shape_cast %20 : vector<256xf32> to vector<1x256xf32>
    %22 = vector.broadcast %21 : vector<1x256xf32> to vector<8x256xf32>
    %23 = arith.subf %19, %22 : vector<8x256xf32>
    %24 = math.exp %23 : vector<8x256xf32>
    %cst_17 = arith.constant dense<0.000000e+00> : vector<256xf32>
    %25 = vector.multi_reduction <add>, %24, %cst_17 [0] : vector<8x256xf32> to vector<256xf32>
    %26 = vector.shape_cast %25 : vector<256xf32> to vector<1x256xf32>
    %27 = tpu.reciprocal %26 {approx = true} : vector<1x256xf32> -> vector<1x256xf32>
    %28 = vector.broadcast %27 : vector<1x256xf32> to vector<8x256xf32>
    %29 = arith.mulf %24, %28 : vector<8x256xf32>
    %30 = arith.truncf %29 : vector<8x256xf32> to vector<8x256xbf16>
    %cst_18 = arith.constant dense<0.000000e+00> : vector<64x256xf32>
    %31 = tpu.matmul %17, %30, %cst_18 {dimension_numbers = #tpu.dot_dimension_numbers<[0], [0], [1], [1], [0, 1, 1, 1], [], []>} : vector<8x64xbf16>, vector<8x256xbf16>, vector<64x256xf32> -> vector<64x256xf32>
    %c0_19 = arith.constant 0 : index
    %c0_20 = arith.constant 0 : index
    %32 = vector.load %arg8[%c0_19, %c0_20] : memref<4x4xbf16, #tpu.memory_space<vmem>>, vector<4x4xbf16>
    %cst_21 = arith.constant dense<0.000000e+00> : vector<4x256xf32>
    %33 = tpu.matmul %32, %9, %cst_21 {dimension_numbers = #tpu.dot_dimension_numbers<[1], [0], [0], [1], [0, 0, 1, 1], [], []>} : vector<4x4xbf16>, vector<4x256xbf16>, vector<4x256xf32> -> vector<4x256xf32>
    %c0_22 = arith.constant 0 : index
    %c0_23 = arith.constant 0 : index
    %34 = vector.load %arg7[%c0_22, %c0_23] : memref<4x64xbf16, #tpu.memory_space<vmem>>, vector<4x64xbf16>
    %35 = arith.truncf %31 : vector<64x256xf32> to vector<64x256xbf16>
    %cst_24 = arith.constant dense<0.000000e+00> : vector<4x256xf32>
    %36 = tpu.matmul %34, %35, %cst_24 {dimension_numbers = #tpu.dot_dimension_numbers<[1], [0], [0], [1], [0, 0, 1, 1], [], []>} : vector<4x64xbf16>, vector<64x256xbf16>, vector<4x256xf32> -> vector<4x256xf32>
    %37 = arith.addf %33, %36 : vector<4x256xf32>
    %c0_25 = arith.constant 0 : index
    %c0_26 = arith.constant 0 : index
    %c0_27 = arith.constant 0 : index
    %38 = vector.load %arg3[%c0_25, %c0_26, %c0_27] : memref<2x4x1xf32, #tpu.memory_space<vmem>>, vector<1x4x1xf32>
    %39 = vector.shape_cast %38 : vector<1x4x1xf32> to vector<4x1xf32>
    %40 = vector.broadcast %39 : vector<4x1xf32> to vector<4x256xf32>
    %41 = arith.addf %37, %40 : vector<4x256xf32>
    %42 = arith.addf %41, %8 : vector<4x256xf32>
    %c0_28 = arith.constant 0 : index
    %c0_29 = arith.constant 0 : index
    %c0_30 = arith.constant 0 : index
    %43 = vector.load %arg9[%c0_28, %c0_29, %c0_30] : memref<2x4x256xf32, #tpu.memory_space<vmem>>, vector<1x4x256xf32>
    %44 = vector.shape_cast %43 : vector<1x4x256xf32> to vector<4x256xf32>
    %45 = vector.shape_cast %42 : vector<4x256xf32> to vector<1x4x256xf32>
    tpu.vector_store %arg9[%c0_28, %c0_29, %c0_30], %45 {strides = array<i32>} : memref<2x4x256xf32, #tpu.memory_space<vmem>>, vector<1x4x256xf32>,
    %c1 = arith.constant 1 : index
    %c0_31 = arith.constant 0 : index
    %c0_32 = arith.constant 0 : index
    %46 = vector.load %arg0[%c1, %c0_31, %c0_32] : memref<2x4x256xf32, #tpu.memory_space<vmem>>, vector<1x4x256xf32>
    %47 = vector.shape_cast %46 : vector<1x4x256xf32> to vector<4x256xf32>
    %48 = arith.truncf %47 : vector<4x256xf32> to vector<4x256xbf16>
    %c0_33 = arith.constant 0 : index
    %c0_34 = arith.constant 0 : index
    %49 = vector.load %arg4[%c0_33, %c0_34] : memref<64x4xbf16, #tpu.memory_space<vmem>>, vector<64x4xbf16>
    %cst_35 = arith.constant dense<0.000000e+00> : vector<64x256xf32>
    %50 = tpu.matmul %49, %48, %cst_35 {dimension_numbers = #tpu.dot_dimension_numbers<[1], [0], [0], [1], [0, 0, 1, 1], [], []>} : vector<64x4xbf16>, vector<4x256xbf16>, vector<64x256xf32> -> vector<64x256xf32>
    %c1_36 = arith.constant 1 : index
    %c0_37 = arith.constant 0 : index
    %c0_38 = arith.constant 0 : index
    %51 = vector.load %arg2[%c1_36, %c0_37, %c0_38] : memref<2x64x1xf32, #tpu.memory_space<vmem>>, vector<1x64x1xf32>
    %52 = vector.shape_cast %51 : vector<1x64x1xf32> to vector<64x1xf32>
    %53 = vector.broadcast %52 : vector<64x1xf32> to vector<64x256xf32>
    %54 = arith.addf %50, %53 : vector<64x256xf32>
    %55 = vector.extract_strided_slice %3 {offsets = [8, 0], sizes = [8, 64], strides = [1, 1]} : vector<16x64xbf16> to vector<8x64xbf16>
    %56 = vector.extract_strided_slice %6 {offsets = [8, 0], sizes = [8, 64], strides = [1, 1]} : vector<16x64xbf16> to vector<8x64xbf16>
    %57 = arith.truncf %54 : vector<64x256xf32> to vector<64x256xbf16>
    %cst_39 = arith.constant dense<0.000000e+00> : vector<8x256xf32>
    %58 = tpu.matmul %55, %57, %cst_39 {dimension_numbers = #tpu.dot_dimension_numbers<[1], [0], [0], [1], [0, 0, 1, 1], [], []>} : vector<8x64xbf16>, vector<64x256xbf16>, vector<8x256xf32> -> vector<8x256xf32>
    %cst_40 = arith.constant dense<0xFF800000> : vector<256xf32>
    %59 = vector.multi_reduction <maximumf>, %58, %cst_40 [0] : vector<8x256xf32> to vector<256xf32>
    %60 = vector.shape_cast %59 : vector<256xf32> to vector<1x256xf32>
    %61 = vector.broadcast %60 : vector<1x256xf32> to vector<8x256xf32>
    %62 = arith.subf %58, %61 : vector<8x256xf32>
    %63 = math.exp %62 : vector<8x256xf32>
    %cst_41 = arith.constant dense<0.000000e+00> : vector<256xf32>
    %64 = vector.multi_reduction <add>, %63, %cst_41 [0] : vector<8x256xf32> to vector<256xf32>
    %65 = vector.shape_cast %64 : vector<256xf32> to vector<1x256xf32>
    %66 = tpu.reciprocal %65 {approx = true} : vector<1x256xf32> -> vector<1x256xf32>
    %67 = vector.broadcast %66 : vector<1x256xf32> to vector<8x256xf32>
    %68 = arith.mulf %63, %67 : vector<8x256xf32>
    %69 = arith.truncf %68 : vector<8x256xf32> to vector<8x256xbf16>
    %cst_42 = arith.constant dense<0.000000e+00> : vector<64x256xf32>
    %70 = tpu.matmul %56, %69, %cst_42 {dimension_numbers = #tpu.dot_dimension_numbers<[0], [0], [1], [1], [0, 1, 1, 1], [], []>} : vector<8x64xbf16>, vector<8x256xbf16>, vector<64x256xf32> -> vector<64x256xf32>
    %c0_43 = arith.constant 0 : index
    %c0_44 = arith.constant 0 : index
    %71 = vector.load %arg8[%c0_43, %c0_44] : memref<4x4xbf16, #tpu.memory_space<vmem>>, vector<4x4xbf16>
    %cst_45 = arith.constant dense<0.000000e+00> : vector<4x256xf32>
    %72 = tpu.matmul %71, %48, %cst_45 {dimension_numbers = #tpu.dot_dimension_numbers<[1], [0], [0], [1], [0, 0, 1, 1], [], []>} : vector<4x4xbf16>, vector<4x256xbf16>, vector<4x256xf32> -> vector<4x256xf32>
    %c0_46 = arith.constant 0 : index
    %c0_47 = arith.constant 0 : index
    %73 = vector.load %arg7[%c0_46, %c0_47] : memref<4x64xbf16, #tpu.memory_space<vmem>>, vector<4x64xbf16>
    %74 = arith.truncf %70 : vector<64x256xf32> to vector<64x256xbf16>
    %cst_48 = arith.constant dense<0.000000e+00> : vector<4x256xf32>
    %75 = tpu.matmul %73, %74, %cst_48 {dimension_numbers = #tpu.dot_dimension_numbers<[1], [0], [0], [1], [0, 0, 1, 1], [], []>} : vector<4x64xbf16>, vector<64x256xbf16>, vector<4x256xf32> -> vector<4x256xf32>
    %76 = arith.addf %72, %75 : vector<4x256xf32>
    %c1_49 = arith.constant 1 : index
    %c0_50 = arith.constant 0 : index
    %c0_51 = arith.constant 0 : index
    %77 = vector.load %arg3[%c1_49, %c0_50, %c0_51] : memref<2x4x1xf32, #tpu.memory_space<vmem>>, vector<1x4x1xf32>
    %78 = vector.shape_cast %77 : vector<1x4x1xf32> to vector<4x1xf32>
    %79 = vector.broadcast %78 : vector<4x1xf32> to vector<4x256xf32>
    %80 = arith.addf %76, %79 : vector<4x256xf32>
    %81 = arith.addf %80, %47 : vector<4x256xf32>
    %c1_52 = arith.constant 1 : index
    %c0_53 = arith.constant 0 : index
    %c0_54 = arith.constant 0 : index
    %82 = vector.load %arg9[%c1_52, %c0_53, %c0_54] : memref<2x4x256xf32, #tpu.memory_space<vmem>>, vector<1x4x256xf32>
    %83 = vector.shape_cast %82 : vector<1x4x256xf32> to vector<4x256xf32>
    %84 = vector.shape_cast %81 : vector<4x256xf32> to vector<1x4x256xf32>
    tpu.vector_store %arg9[%c1_52, %c0_53, %c0_54], %84 {strides = array<i32>} : memref<2x4x256xf32, #tpu.memory_space<vmem>>, vector<1x4x256xf32>,
    return
  }
}

</mosaic_0001>

<llo_original>
// kernel: _forward_crossattn.1
$region0: #{_forward_crossattn.1}
  #allocation0 [shape = 'u32[]', space=smem, size = 0x4, offset = 0x4, fixed_abs, tag = 'smem constant byte address 0x4 - core index']
  #allocation1 [shape = 'u32[144,128]{1,0:T(1,128)}', space=vmem, size = 0x12000, scoped, tag = 'internal scratch']
  %s0 = inlined_call_operand.vmem [shape: f32[2,4,256], index: 0, kind: input, shape index: {}]
  %s1 = inlined_call_operand.vmem [shape: bf16[16,32], index: 1, kind: input, shape index: {}]
  %s2 = inlined_call_operand.vmem [shape: f32[2,64,1], index: 2, kind: input, shape index: {}]
  %s3 = inlined_call_operand.vmem [shape: f32[2,4,1], index: 3, kind: input, shape index: {}]
  %s4 = inlined_call_operand.vmem [shape: bf16[64,4], index: 4, kind: input, shape index: {}]
  %s5 = inlined_call_operand.vmem [shape: bf16[32,64], index: 5, kind: input, shape index: {}]
  %s6 = inlined_call_operand.vmem [shape: bf16[32,64], index: 6, kind: input, shape index: {}]
  %s7 = inlined_call_operand.vmem [shape: bf16[4,64], index: 7, kind: input, shape index: {}]
  %s8 = inlined_call_operand.vmem [shape: bf16[4,4], index: 8, kind: input, shape index: {}]
  %s9 = inlined_call_operand.vmem [shape: f32[2,4,256], index: 9, kind: output, shape index: {}]
  %s10 = sld [smem:[#allocation0]]
  $region46: #{_forward_crossattn.1} parent=0
    _
  %s12 = ssub.s32 1, %s10
  %s13 = scalar_select 0, %s12, %s10
  // Predicated region
  $region2: #{_forward_crossattn.1} parent=0 // pred_check
    _
  $region3: #{_forward_crossattn.1} parent=0 // pred_check_branch
    %15 = sbr.rel (0) target = $region5
  $region4: #{_forward_crossattn.1} parent=0 // pred_region
    _
  $region5: #{_forward_crossattn.1} parent=0 // pred_fallthru
    _
  // Predicated region
  $region6: #{_forward_crossattn.1} parent=0 // pred_check
    _
  $region7: #{_forward_crossattn.1} parent=0 // pred_check_branch
    %17 = sbr.rel (0) target = $region9
  $region8: #{_forward_crossattn.1} parent=0 // pred_region
    _
  $region9: #{_forward_crossattn.1} parent=0 // pred_fallthru
    _
  // Predicated region
  $region10: #{_forward_crossattn.1} parent=0 // pred_check
    _
  $region11: #{_forward_crossattn.1} parent=0 // pred_check_branch
    %19 = sbr.rel (0) target = $region13
  $region12: #{_forward_crossattn.1} parent=0 // pred_region
    _
  $region13: #{_forward_crossattn.1} parent=0 // pred_fallthru
    _
  // Predicated region
  $region14: #{_forward_crossattn.1} parent=0 // pred_check
    _
  $region15: #{_forward_crossattn.1} parent=0 // pred_check_branch
    %21 = sbr.rel (0) target = $region17
  $region16: #{_forward_crossattn.1} parent=0 // pred_region
    _
  $region17: #{_forward_crossattn.1} parent=0 // pred_fallthru
    _
  // Predicated region
  $region18: #{_forward_crossattn.1} parent=0 // pred_check
    _
  $region19: #{_forward_crossattn.1} parent=0 // pred_check_branch
    %23 = sbr.rel (0) target = $region21
  $region20: #{_forward_crossattn.1} parent=0 // pred_region
    _
  $region21: #{_forward_crossattn.1} parent=0 // pred_fallthru
    _
  // Predicated region
  $region22: #{_forward_crossattn.1} parent=0 // pred_check
    _
  $region23: #{_forward_crossattn.1} parent=0 // pred_check_branch
    %25 = sbr.rel (0) target = $region25
  $region24: #{_forward_crossattn.1} parent=0 // pred_region
    _
  $region25: #{_forward_crossattn.1} parent=0 // pred_fallthru
    _
  // Predicated region
  $region26: #{_forward_crossattn.1} parent=0 // pred_check
    _
  $region27: #{_forward_crossattn.1} parent=0 // pred_check_branch
    %27 = sbr.rel (0) target = $region29
  $region28: #{_forward_crossattn.1} parent=0 // pred_region
    _
  $region29: #{_forward_crossattn.1} parent=0 // pred_fallthru
    _
  // Predicated region
  $region30: #{_forward_crossattn.1} parent=0 // pred_check
    _
  $region31: #{_forward_crossattn.1} parent=0 // pred_check_branch
    %29 = sbr.rel (0) target = $region33
  $region32: #{_forward_crossattn.1} parent=0 // pred_region
    _
  $region33: #{_forward_crossattn.1} parent=0 // pred_fallthru
    _
  // Predicated region
  $region34: #{_forward_crossattn.1} parent=0 // pred_check
    _
  $region35: #{_forward_crossattn.1} parent=0 // pred_check_branch
    %31 = sbr.rel (0) target = $region37
  $region36: #{_forward_crossattn.1} parent=0 // pred_region
    _
  $region37: #{_forward_crossattn.1} parent=0 // pred_fallthru
    _
  %v33 = vld [vmem:[%s1] sm:$0xf]
  %v34 = vld [vmem:[%s1 + $0x4] sm:$0xf]
  %v35 = vld [vmem:[%s5] sm:$0xf]
  %v36 = vld [vmem:[%s5 + $0x4] sm:$0xf]
  %v37 = vld [vmem:[%s5 + $0x8] sm:$0xf]
  %v38 = vld [vmem:[%s5 + $0xc] sm:$0xf]
  %v41 = vunpack.c.l.b16 %v33
  %v42 = vunpack.c.l.b16 %v34
  %v43 = vpack.c.b16 %v42, %v41
  %v48 = vunpack.c.l.b16 %v35
  %v49 = vunpack.c.l.b16 %v36
  %v50 = vunpack.c.l.b16 %v37
  %v51 = vunpack.c.l.b16 %v38
  %v52 = vpack.c.b16 %v49, %v48
  %v53 = vpack.c.b16 %v51, %v50
  %vm56 = vcmask 261120
  %v58 = vsel %vm56, %v43, 0
  %60 = vmatprep.subr.bf16.mxu0 0
  %61 = vmatpush1.bf16.msra.mxu0 %v52
  %62 = vmatprep.subr.bf16.mxu0 0
  %63 = vmatpush1.bf16.msra.mxu0 %v53
  %64 = vmatprep.subr.bf16.mxu0 0
  %65 = vmatpush1.bf16.msra.mxu0 0
  %66 = vmatprep.subr.bf16.mxu0 0
  %67 = vmatpush1.bf16.msra.mxu0 0
  %68 = vmatprep.subr.bf16.mxu0 0
  %69 = vmatpush1.bf16.msra.mxu0 0
  %70 = vmatprep.subr.bf16.mxu0 0
  %71 = vmatpush1.bf16.msra.mxu0 0
  %72 = vmatprep.subr.bf16.mxu0 0
  %73 = vmatpush1.bf16.msra.mxu0 0
  %74 = vmatprep.subr.bf16.mxu0 0
  %75 = vmatpush1.bf16.msra.mxu0 0
  %76 = vmatprep.subr.bf16.mxu0 0
  %77 = vmatpush1.bf16.msra.mxu0 0
  %78 = vmatprep.subr.bf16.mxu0 0
  %79 = vmatpush1.bf16.msra.mxu0 0
  %80 = vmatprep.subr.bf16.mxu0 0
  %81 = vmatpush1.bf16.msra.mxu0 0
  %82 = vmatprep.subr.bf16.mxu0 0
  %83 = vmatpush1.bf16.msra.mxu0 0
  %84 = vmatprep.subr.bf16.mxu0 0
  %85 = vmatpush1.bf16.msra.mxu0 0
  %86 = vmatprep.subr.bf16.mxu0 0
  %87 = vmatpush1.bf16.msra.mxu0 0
  %88 = vmatprep.subr.bf16.mxu0 0
  %89 = vmatpush1.bf16.msra.mxu0 0
  %90 = vmatprep.subr.bf16.mxu0 0
  %91 = vmatpush1.bf16.msra.mxu0 0
  %92 = vmatprep.mubr.bf16.mxu0 0
  %93 = vmatmul.mubr.bf16.gmra.mrb[0].mxu0 %v58
  %v94 = vpop.f32.mrb[0].mxu0
  %v95 = vadd.f32 0.0, %v94
  %v96 = vpop.f32.mrb[0].mxu0
  %v97 = vpop.f32.mrb[0].mxu0
  %v98 = vadd.f32 0.0, %v97
  %v99 = vpop.f32.mrb[0].mxu0
  %100 = vdwg.mxu0
  %v101 = vpack.c.bf16 %v98, %v95
  %v102 = vld [vmem:[%s6] sm:$0xf]
  %v103 = vld [vmem:[%s6 + $0x4] sm:$0xf]
  %v104 = vld [vmem:[%s6 + $0x8] sm:$0xf]
  %v105 = vld [vmem:[%s6 + $0xc] sm:$0xf]
  %v110 = vunpack.c.l.b16 %v102
  %v111 = vunpack.c.l.b16 %v103
  %v112 = vunpack.c.l.b16 %v104
  %v113 = vunpack.c.l.b16 %v105
  %v114 = vpack.c.b16 %v111, %v110
  %v115 = vpack.c.b16 %v113, %v112
  %118 = vmatprep.subr.bf16.mxu0 0
  %119 = vmatpush1.bf16.msra.mxu0 %v114
  %120 = vmatprep.subr.bf16.mxu0 0
  %121 = vmatpush1.bf16.msra.mxu0 %v115
  %122 = vmatprep.subr.bf16.mxu0 0
  %123 = vmatpush1.bf16.msra.mxu0 0
  %124 = vmatprep.subr.bf16.mxu0 0
  %125 = vmatpush1.bf16.msra.mxu0 0
  %126 = vmatprep.subr.bf16.mxu0 0
  %127 = vmatpush1.bf16.msra.mxu0 0
  %128 = vmatprep.subr.bf16.mxu0 0
  %129 = vmatpush1.bf16.msra.mxu0 0
  %130 = vmatprep.subr.bf16.mxu0 0
  %131 = vmatpush1.bf16.msra.mxu0 0
  %132 = vmatprep.subr.bf16.mxu0 0
  %133 = vmatpush1.bf16.msra.mxu0 0
  %134 = vmatprep.subr.bf16.mxu0 0
  %135 = vmatpush1.bf16.msra.mxu0 0
  %136 = vmatprep.subr.bf16.mxu0 0
  %137 = vmatpush1.bf16.msra.mxu0 0
  %138 = vmatprep.subr.bf16.mxu0 0
  %139 = vmatpush1.bf16.msra.mxu0 0
  %140 = vmatprep.subr.bf16.mxu0 0
  %141 = vmatpush1.bf16.msra.mxu0 0
  %142 = vmatprep.subr.bf16.mxu0 0
  %143 = vmatpush1.bf16.msra.mxu0 0
  %144 = vmatprep.subr.bf16.mxu0 0
  %145 = vmatpush1.bf16.msra.mxu0 0
  %146 = vmatprep.subr.bf16.mxu0 0
  %147 = vmatpush1.bf16.msra.mxu0 0
  %148 = vmatprep.subr.bf16.mxu0 0
  %149 = vmatpush1.bf16.msra.mxu0 0
  %150 = vmatprep.mubr.bf16.mxu0 0
  %151 = vmatmul.mubr.bf16.gmra.mrb[0].mxu0 %v58
  %v152 = vpop.f32.mrb[0].mxu0
  %v153 = vadd.f32 0.0, %v152
  %v154 = vpop.f32.mrb[0].mxu0
  %v155 = vpop.f32.mrb[0].mxu0
  %v156 = vadd.f32 0.0, %v155
  %v157 = vpop.f32.mrb[0].mxu0
  %158 = vdwg.mxu0
  %v159 = vpack.c.bf16 %v156, %v153
  %v160 = vld [vmem:[%s0] sm:$0xff]
  %v162 = vcombine.high %v160, %v160
  %v164 = vpack.c.bf16 %v160, %v160
  %v165 = vpack.c.bf16 %v162, %v162
  %v166 = vld [vmem:[%s4] sm:$0xf]
  %v167 = vld [vmem:[%s4 + $0x4] sm:$0xf]
  %v168 = vld [vmem:[%s4 + $0x8] sm:$0xf]
  %v169 = vld [vmem:[%s4 + $0xc] sm:$0xf]
  %v170 = vld [vmem:[%s4 + $0x10] sm:$0xf]
  %v171 = vld [vmem:[%s4 + $0x14] sm:$0xf]
  %v172 = vld [vmem:[%s4 + $0x18] sm:$0xf]
  %v173 = vld [vmem:[%s4 + $0x1c] sm:$0xf]
  %v174 = vld [vmem:[%s2] sm:$0xff]
  %v175 = vld [vmem:[%s2 + $0x8] sm:$0xff]
  %v176 = vld [vmem:[%s2 + $0x10] sm:$0xff]
  %v177 = vld [vmem:[%s2 + $0x18] sm:$0xff]
  %v178 = vld [vmem:[%s2 + $0x20] sm:$0xff]
  %v179 = vld [vmem:[%s2 + $0x28] sm:$0xff]
  %v180 = vld [vmem:[%s2 + $0x30] sm:$0xff]
  %v181 = vld [vmem:[%s2 + $0x38] sm:$0xff]
  %183 = vset.pattern.permute.xlu0 0
  %184 = vperm.xlu0 %183, %v174
  %v185 = vpop.permute.xlu0 %184
  %188 = vset.pattern.permute.xlu0 0
  %189 = vperm.xlu0 %188, %v175
  %v190 = vpop.permute.xlu0 %189
  %193 = vset.pattern.permute.xlu0 0
  %194 = vperm.xlu0 %193, %v176
  %v195 = vpop.permute.xlu0 %194
  %198 = vset.pattern.permute.xlu0 0
  %199 = vperm.xlu0 %198, %v177
  %v200 = vpop.permute.xlu0 %199
  %203 = vset.pattern.permute.xlu0 0
  %204 = vperm.xlu0 %203, %v178
  %v205 = vpop.permute.xlu0 %204
  %208 = vset.pattern.permute.xlu0 0
  %209 = vperm.xlu0 %208, %v179
  %v210 = vpop.permute.xlu0 %209
  %213 = vset.pattern.permute.xlu0 0
  %214 = vperm.xlu0 %213, %v180
  %v215 = vpop.permute.xlu0 %214
  %218 = vset.pattern.permute.xlu0 0
  %219 = vperm.xlu0 %218, %v181
  %v220 = vpop.permute.xlu0 %219
  %v230 = vunpack.c.l.b16 %v166
  %v231 = vunpack.c.l.b16 %v167
  %v232 = vunpack.c.l.b16 %v168
  %v233 = vunpack.c.l.b16 %v169
  %v234 = vunpack.c.l.b16 %v170
  %v235 = vunpack.c.l.b16 %v171
  %v236 = vunpack.c.l.b16 %v172
  %v237 = vunpack.c.l.b16 %v173
  %v238 = vpack.c.b16 %v231, %v230
  %v239 = vpack.c.b16 %v233, %v232
  %v240 = vpack.c.b16 %v235, %v234
  %v241 = vpack.c.b16 %v237, %v236
  %vm242 = vcmask 31744
  %v244 = vsel %vm242, %v238, 0
  %v247 = vsel %vm242, %v239, 0
  %v250 = vsel %vm242, %v240, 0
  %v253 = vsel %vm242, %v241, 0
  %vm255 = vcmask 1041408
  %v257 = vsel %vm255, %v164, 0
  %v260 = vsel %vm255, %v165, 0
  %262 = vmatprep.subr.bf16.mxu0 %v260
  %263 = vmatpush1.bf16.msra.mxu0 %v257
  %264 = vmatprep.subr.bf16.mxu0 0
  %265 = vmatpush1.bf16.msra.mxu0 0
  %266 = vmatprep.subr.bf16.mxu0 0
  %267 = vmatpush1.bf16.msra.mxu0 0
  %268 = vmatprep.subr.bf16.mxu0 0
  %269 = vmatpush1.bf16.msra.mxu0 0
  %270 = vmatprep.subr.bf16.mxu0 0
  %271 = vmatpush1.bf16.msra.mxu0 0
  %272 = vmatprep.subr.bf16.mxu0 0
  %273 = vmatpush1.bf16.msra.mxu0 0
  %274 = vmatprep.subr.bf16.mxu0 0
  %275 = vmatpush1.bf16.msra.mxu0 0
  %276 = vmatprep.subr.bf16.mxu0 0
  %277 = vmatpush1.bf16.msra.mxu0 0
  %278 = vmatprep.subr.bf16.mxu0 0
  %279 = vmatpush1.bf16.msra.mxu0 0
  %280 = vmatprep.subr.bf16.mxu0 0
  %281 = vmatpush1.bf16.msra.mxu0 0
  %282 = vmatprep.subr.bf16.mxu0 0
  %283 = vmatpush1.bf16.msra.mxu0 0
  %284 = vmatprep.subr.bf16.mxu0 0
  %285 = vmatpush1.bf16.msra.mxu0 0
  %286 = vmatprep.subr.bf16.mxu0 0
  %287 = vmatpush1.bf16.msra.mxu0 0
  %288 = vmatprep.subr.bf16.mxu0 0
  %289 = vmatpush1.bf16.msra.mxu0 0
  %290 = vmatprep.subr.bf16.mxu0 0
  %291 = vmatpush1.bf16.msra.mxu0 0
  %292 = vmatprep.subr.bf16.mxu0 0
  %293 = vmatpush1.bf16.msra.mxu0 0
  %294 = vmatprep.mubr.bf16.mxu0 0
  %295 = vmatmul.mubr.bf16.gmra.mrb[0].mxu0 %v244
  %v296 = vpop.f32.mrb[0].mxu0
  %v297 = vadd.f32 %v185, %v296
  %v298 = vpop.f32.mrb[0].mxu0
  %v299 = vadd.f32 %v185, %v298
  %v300 = vpop.f32.mrb[0].mxu0
  %v301 = vadd.f32 %v190, %v300
  %v302 = vpop.f32.mrb[0].mxu0
  %v303 = vadd.f32 %v190, %v302
  %304 = vmatprep.mubr.bf16.mxu0 0
  %305 = vmatmul.mubr.bf16.gmra.mrb[0].mxu0 %v247
  %v306 = vpop.f32.mrb[0].mxu0
  %v307 = vadd.f32 %v195, %v306
  %v308 = vpop.f32.mrb[0].mxu0
  %v309 = vadd.f32 %v195, %v308
  %v310 = vpop.f32.mrb[0].mxu0
  %v311 = vadd.f32 %v200, %v310
  %v312 = vpop.f32.mrb[0].mxu0
  %v313 = vadd.f32 %v200, %v312
  %314 = vmatprep.mubr.bf16.mxu0 0
  %315 = vmatmul.mubr.bf16.gmra.mrb[0].mxu0 %v250
  %v316 = vpop.f32.mrb[0].mxu0
  %v317 = vadd.f32 %v205, %v316
  %v318 = vpop.f32.mrb[0].mxu0
  %v319 = vadd.f32 %v205, %v318
  %v320 = vpop.f32.mrb[0].mxu0
  %v321 = vadd.f32 %v210, %v320
  %v322 = vpop.f32.mrb[0].mxu0
  %v323 = vadd.f32 %v210, %v322
  %324 = vmatprep.mubr.bf16.mxu0 0
  %325 = vmatmul.mubr.bf16.gmra.mrb[0].mxu0 %v253
  %v326 = vpop.f32.mrb[0].mxu0
  %v327 = vadd.f32 %v215, %v326
  %v328 = vpop.f32.mrb[0].mxu0
  %v329 = vadd.f32 %v215, %v328
  %v330 = vpop.f32.mrb[0].mxu0
  %v331 = vadd.f32 %v220, %v330
  %v332 = vpop.f32.mrb[0].mxu0
  %v333 = vadd.f32 %v220, %v332
  %334 = vdwg.mxu0
  %v335 = vpack.c.bf16 %v301, %v297
  %v336 = vpack.c.bf16 %v303, %v299
  %v337 = vpack.c.bf16 %v311, %v307
  %v338 = vpack.c.bf16 %v313, %v309
  %v339 = vpack.c.bf16 %v321, %v317
  %v340 = vpack.c.bf16 %v323, %v319
  %v341 = vpack.c.bf16 %v331, %v327
  %v342 = vpack.c.bf16 %v333, %v329
  %vm343 = vcmask 523264
  %v345 = vsel %vm343, %v101, 0
  %347 = vmatprep.subr.bf16.mxu0 %v336
  %348 = vmatpush1.bf16.msra.mxu0 %v335
  %349 = vmatprep.subr.bf16.mxu0 %v338
  %350 = vmatpush1.bf16.msra.mxu0 %v337
  %351 = vmatprep.subr.bf16.mxu0 %v340
  %352 = vmatpush1.bf16.msra.mxu0 %v339
  %353 = vmatprep.subr.bf16.mxu0 %v342
  %354 = vmatpush1.bf16.msra.mxu0 %v341
  %355 = vmatprep.subr.bf16.mxu0 0
  %356 = vmatpush1.bf16.msra.mxu0 0
  %357 = vmatprep.subr.bf16.mxu0 0
  %358 = vmatpush1.bf16.msra.mxu0 0
  %359 = vmatprep.subr.bf16.mxu0 0
  %360 = vmatpush1.bf16.msra.mxu0 0
  %361 = vmatprep.subr.bf16.mxu0 0
  %362 = vmatpush1.bf16.msra.mxu0 0
  %363 = vmatprep.subr.bf16.mxu0 0
  %364 = vmatpush1.bf16.msra.mxu0 0
  %365 = vmatprep.subr.bf16.mxu0 0
  %366 = vmatpush1.bf16.msra.mxu0 0
  %367 = vmatprep.subr.bf16.mxu0 0
  %368 = vmatpush1.bf16.msra.mxu0 0
  %369 = vmatprep.subr.bf16.mxu0 0
  %370 = vmatpush1.bf16.msra.mxu0 0
  %371 = vmatprep.subr.bf16.mxu0 0
  %372 = vmatpush1.bf16.msra.mxu0 0
  %373 = vmatprep.subr.bf16.mxu0 0
  %374 = vmatpush1.bf16.msra.mxu0 0
  %375 = vmatprep.subr.bf16.mxu0 0
  %376 = vmatpush1.bf16.msra.mxu0 0
  %377 = vmatprep.subr.bf16.mxu0 0
  %378 = vmatpush1.bf16.msra.mxu0 0
  %379 = vmatprep.mubr.bf16.mxu0 0
  %380 = vmatmul.mubr.bf16.gmra.mrb[0].mxu0 %v345
  %v381 = vpop.f32.mrb[0].mxu0
  %v382 = vadd.f32 0.0, %v381
  %v383 = vpop.f32.mrb[0].mxu0
  %v384 = vadd.f32 0.0, %v383
  %v385 = vpop.f32.mrb[0].mxu0
  %v386 = vpop.f32.mrb[0].mxu0
  %387 = vdwg.mxu0
  %v388 = vrot.slane %v382, 4
  %v389 = vmax.f32 %v382, %v388
  %v390 = vrot.slane %v389, 2
  %v391 = vmax.f32 %v389, %v390
  %v392 = vrot.slane %v391, 1
  %v393 = vmax.f32 %v391, %v392
  %v394 = vrot.slane %v384, 4
  %v395 = vmax.f32 %v384, %v394
  %v396 = vrot.slane %v395, 2
  %v397 = vmax.f32 %v395, %v396
  %v398 = vrot.slane %v397, 1
  %v399 = vmax.f32 %v397, %v398
  %v400 = vsub.f32 %v382, %v393
  %v401 = vsub.f32 %v384, %v399
  %v402 = vmul.f32 %v400, 1.442695
  %v403 = vpow.pop %v402
  %v404 = vmul.f32 %v401, 1.442695
  %v405 = vpow.pop %v404
  %v406 = vrot.slane %v403, 4
  %v407 = vadd.f32 %v403, %v406
  %v408 = vrot.slane %v407, 2
  %v409 = vadd.f32 %v407, %v408
  %v410 = vrot.slane %v409, 1
  %v411 = vadd.f32 %v409, %v410
  %v412 = vrot.slane %v405, 4
  %v413 = vadd.f32 %v405, %v412
  %v414 = vrot.slane %v413, 2
  %v415 = vadd.f32 %v413, %v414
  %v416 = vrot.slane %v415, 1
  %v417 = vadd.f32 %v415, %v416
  %v418 = vrcp.pop %v411
  %v419 = vrcp.pop %v417
  %v420 = vmul.f32 %v403, %v418
  %v421 = vmul.f32 %v405, %v419
  %v422 = vpack.c.bf16 %v420, %v420
  %v423 = vpack.c.bf16 %v421, %v421
  %424 = vxpose.xlu0.c.b16.start [1/8] %v159, 128
  %425 = vxpose.xlu0.c.b16.cont [2/8] 0, 128
  %426 = vxpose.xlu0.c.b16.cont [3/8] 0, 128
  %427 = vxpose.xlu0.c.b16.cont [4/8] 0, 128
  %428 = vxpose.xlu0.c.b16.cont [5/8] 0, 128
  %429 = vxpose.xlu0.c.b16.cont [6/8] 0, 128
  %430 = vxpose.xlu0.c.b16.cont [7/8] 0, 128
  %431 = vxpose.xlu0.c.b16.end [8/8] 0, 128
  %v432 = vpop.trf.xlu0
  %v433 = vpop.trf.xlu0
  %v434 = vpop.trf.xlu0
  %v435 = vpop.trf.xlu0
  %v436 = vpop.trf.xlu0
  %v437 = vpop.trf.xlu0
  %v438 = vpop.trf.xlu0
  %v439 = vpop.trf.xlu0
  %vm440 = vcmask 64512
  %v442 = vsel %vm440, %v432, 0
  %v445 = vsel %vm440, %v433, 0
  %v448 = vsel %vm440, %v434, 0
  %v451 = vsel %vm440, %v435, 0
  %vm453 = vcmask 1043456
  %v455 = vsel %vm453, %v422, 0
  %v458 = vsel %vm453, %v423, 0
  %460 = vmatprep.subr.bf16.mxu0 %v458
  %461 = vmatpush1.bf16.msra.mxu0 %v455
  %462 = vmatprep.subr.bf16.mxu0 0
  %463 = vmatpush1.bf16.msra.mxu0 0
  %464 = vmatprep.subr.bf16.mxu0 0
  %465 = vmatpush1.bf16.msra.mxu0 0
  %466 = vmatprep.subr.bf16.mxu0 0
  %467 = vmatpush1.bf16.msra.mxu0 0
  %468 = vmatprep.subr.bf16.mxu0 0
  %469 = vmatpush1.bf16.msra.mxu0 0
  %470 = vmatprep.subr.bf16.mxu0 0
  %471 = vmatpush1.bf16.msra.mxu0 0
  %472 = vmatprep.subr.bf16.mxu0 0
  %473 = vmatpush1.bf16.msra.mxu0 0
  %474 = vmatprep.subr.bf16.mxu0 0
  %475 = vmatpush1.bf16.msra.mxu0 0
  %476 = vmatprep.subr.bf16.mxu0 0
  %477 = vmatpush1.bf16.msra.mxu0 0
  %478 = vmatprep.subr.bf16.mxu0 0
  %479 = vmatpush1.bf16.msra.mxu0 0
  %480 = vmatprep.subr.bf16.mxu0 0
  %481 = vmatpush1.bf16.msra.mxu0 0
  %482 = vmatprep.subr.bf16.mxu0 0
  %483 = vmatpush1.bf16.msra.mxu0 0
  %484 = vmatprep.subr.bf16.mxu0 0
  %485 = vmatpush1.bf16.msra.mxu0 0
  %486 = vmatprep.subr.bf16.mxu0 0
  %487 = vmatpush1.bf16.msra.mxu0 0
  %488 = vmatprep.subr.bf16.mxu0 0
  %489 = vmatpush1.bf16.msra.mxu0 0
  %490 = vmatprep.subr.bf16.mxu0 0
  %491 = vmatpush1.bf16.msra.mxu0 0
  %492 = vmatprep.mubr.bf16.mxu0 0
  %493 = vmatmul.mubr.bf16.gmra.mrb[0].mxu0 %v442
  %v494 = vpop.f32.mrb[0].mxu0
  %v495 = vadd.f32 0.0, %v494
  %v496 = vpop.f32.mrb[0].mxu0
  %v497 = vadd.f32 0.0, %v496
  %v498 = vpop.f32.mrb[0].mxu0
  %v499 = vadd.f32 0.0, %v498
  %v500 = vpop.f32.mrb[0].mxu0
  %v501 = vadd.f32 0.0, %v500
  %502 = vmatprep.mubr.bf16.mxu0 0
  %503 = vmatmul.mubr.bf16.gmra.mrb[0].mxu0 %v445
  %v504 = vpop.f32.mrb[0].mxu0
  %v505 = vadd.f32 0.0, %v504
  %v506 = vpop.f32.mrb[0].mxu0
  %v507 = vadd.f32 0.0, %v506
  %v508 = vpop.f32.mrb[0].mxu0
  %v509 = vadd.f32 0.0, %v508
  %v510 = vpop.f32.mrb[0].mxu0
  %v511 = vadd.f32 0.0, %v510
  %512 = vmatprep.mubr.bf16.mxu0 0
  %513 = vmatmul.mubr.bf16.gmra.mrb[0].mxu0 %v448
  %v514 = vpop.f32.mrb[0].mxu0
  %v515 = vadd.f32 0.0, %v514
  %v516 = vpop.f32.mrb[0].mxu0
  %v517 = vadd.f32 0.0, %v516
  %v518 = vpop.f32.mrb[0].mxu0
  %v519 = vadd.f32 0.0, %v518
  %v520 = vpop.f32.mrb[0].mxu0
  %v521 = vadd.f32 0.0, %v520
  %522 = vmatprep.mubr.bf16.mxu0 0
  %523 = vmatmul.mubr.bf16.gmra.mrb[0].mxu0 %v451
  %v524 = vpop.f32.mrb[0].mxu0
  %v525 = vadd.f32 0.0, %v524
  %v526 = vpop.f32.mrb[0].mxu0
  %v527 = vadd.f32 0.0, %v526
  %v528 = vpop.f32.mrb[0].mxu0
  %v529 = vadd.f32 0.0, %v528
  %v530 = vpop.f32.mrb[0].mxu0
  %v531 = vadd.f32 0.0, %v530
  %532 = vdwg.mxu0
  %v533 = vld [vmem:[%s8] sm:$0x3]
  %v534 = vld [vmem:[%s7] sm:$0x3]
  %v535 = vpack.c.bf16 %v499, %v495
  %v536 = vpack.c.bf16 %v501, %v497
  %v537 = vpack.c.bf16 %v509, %v505
  %v538 = vpack.c.bf16 %v511, %v507
  %v539 = vpack.c.bf16 %v519, %v515
  %v540 = vpack.c.bf16 %v521, %v517
  %v541 = vpack.c.bf16 %v529, %v525
  %v542 = vpack.c.bf16 %v531, %v527
  %v544 = vsel %vm343, %v534, 0
  %546 = vmatprep.subr.bf16.mxu0 %v536
  %547 = vmatpush1.bf16.msra.mxu0 %v535
  %548 = vmatprep.subr.bf16.mxu0 %v538
  %549 = vmatpush1.bf16.msra.mxu0 %v537
  %550 = vmatprep.subr.bf16.mxu0 %v540
  %551 = vmatpush1.bf16.msra.mxu0 %v539
  %552 = vmatprep.subr.bf16.mxu0 %v542
  %553 = vmatpush1.bf16.msra.mxu0 %v541
  %554 = vmatprep.subr.bf16.mxu0 0
  %555 = vmatpush1.bf16.msra.mxu0 0
  %556 = vmatprep.subr.bf16.mxu0 0
  %557 = vmatpush1.bf16.msra.mxu0 0
  %558 = vmatprep.subr.bf16.mxu0 0
  %559 = vmatpush1.bf16.msra.mxu0 0
  %560 = vmatprep.subr.bf16.mxu0 0
  %561 = vmatpush1.bf16.msra.mxu0 0
  %562 = vmatprep.subr.bf16.mxu0 0
  %563 = vmatpush1.bf16.msra.mxu0 0
  %564 = vmatprep.subr.bf16.mxu0 0
  %565 = vmatpush1.bf16.msra.mxu0 0
  %566 = vmatprep.subr.bf16.mxu0 0
  %567 = vmatpush1.bf16.msra.mxu0 0
  %568 = vmatprep.subr.bf16.mxu0 0
  %569 = vmatpush1.bf16.msra.mxu0 0
  %570 = vmatprep.subr.bf16.mxu0 0
  %571 = vmatpush1.bf16.msra.mxu0 0
  %572 = vmatprep.subr.bf16.mxu0 0
  %573 = vmatpush1.bf16.msra.mxu0 0
  %574 = vmatprep.subr.bf16.mxu0 0
  %575 = vmatpush1.bf16.msra.mxu0 0
  %576 = vmatprep.subr.bf16.mxu0 0
  %577 = vmatpush1.bf16.msra.mxu0 0
  %578 = vmatprep.mubr.bf16.mxu0 0
  %579 = vmatmul.mubr.bf16.gmra.mrb[0].mxu0 %v544
  %v580 = vpop.f32.mrb[0].mxu0
  %v581 = vadd.f32 0.0, %v580
  %v582 = vpop.f32.mrb[0].mxu0
  %v583 = vadd.f32 0.0, %v582
  %v584 = vpop.f32.mrb[0].mxu0
  %v585 = vpop.f32.mrb[0].mxu0
  %586 = vdwg.mxu0
  %v588 = vsel %vm242, %v533, 0
  %590 = vmatprep.subr.bf16.mxu0 %v260
  %591 = vmatpush1.bf16.msra.mxu0 %v257
  %592 = vmatprep.subr.bf16.mxu0 0
  %593 = vmatpush1.bf16.msra.mxu0 0
  %594 = vmatprep.subr.bf16.mxu0 0
  %595 = vmatpush1.bf16.msra.mxu0 0
  %596 = vmatprep.subr.bf16.mxu0 0
  %597 = vmatpush1.bf16.msra.mxu0 0
  %598 = vmatprep.subr.bf16.mxu0 0
  %599 = vmatpush1.bf16.msra.mxu0 0
  %600 = vmatprep.subr.bf16.mxu0 0
  %601 = vmatpush1.bf16.msra.mxu0 0
  %602 = vmatprep.subr.bf16.mxu0 0
  %603 = vmatpush1.bf16.msra.mxu0 0
  %604 = vmatprep.subr.bf16.mxu0 0
  %605 = vmatpush1.bf16.msra.mxu0 0
  %606 = vmatprep.subr.bf16.mxu0 0
  %607 = vmatpush1.bf16.msra.mxu0 0
  %608 = vmatprep.subr.bf16.mxu0 0
  %609 = vmatpush1.bf16.msra.mxu0 0
  %610 = vmatprep.subr.bf16.mxu0 0
  %611 = vmatpush1.bf16.msra.mxu0 0
  %612 = vmatprep.subr.bf16.mxu0 0
  %613 = vmatpush1.bf16.msra.mxu0 0
  %614 = vmatprep.subr.bf16.mxu0 0
  %615 = vmatpush1.bf16.msra.mxu0 0
  %616 = vmatprep.subr.bf16.mxu0 0
  %617 = vmatpush1.bf16.msra.mxu0 0
  %618 = vmatprep.subr.bf16.mxu0 0
  %619 = vmatpush1.bf16.msra.mxu0 0
  %620 = vmatprep.subr.bf16.mxu0 0
  %621 = vmatpush1.bf16.msra.mxu0 0
  %622 = vmatprep.mubr.bf16.mxu0 0
  %623 = vmatmul.mubr.bf16.gmra.mrb[0].mxu0 %v588
  %v624 = vpop.f32.mrb[0].mxu0
  %v625 = vadd.f32 %v581, %v624
  %v626 = vpop.f32.mrb[0].mxu0
  %v627 = vadd.f32 %v583, %v626
  %v628 = vpop.f32.mrb[0].mxu0
  %v629 = vpop.f32.mrb[0].mxu0
  %630 = vdwg.mxu0
  %v631 = vld [vmem:[%s3] sm:$0xf]
  %633 = vset.pattern.permute.xlu0 0
  %634 = vperm.xlu0 %633, %v631
  %v635 = vpop.permute.xlu0 %634
  %v637 = vadd.f32 %v625, %v635
  %v638 = vadd.f32 %v627, %v635
  %v639 = vadd.f32 %v637, %v160
  %v640 = vadd.f32 %v638, %v162
  %v643 = vcombine.low %v639, %v640
  %645 = vst [vmem:[%s9] sm:$0xff] %v643
  %s646 = scalar_lea.vmem %s0, 8
  %v647 = vld [vmem:[%s646] sm:$0xff]
  %v649 = vcombine.high %v647, %v647
  %v651 = vpack.c.bf16 %v647, %v647
  %v652 = vpack.c.bf16 %v649, %v649
  %v653 = vld [vmem:[%s4] sm:$0xf]
  %v654 = vld [vmem:[%s4 + $0x4] sm:$0xf]
  %v655 = vld [vmem:[%s4 + $0x8] sm:$0xf]
  %v656 = vld [vmem:[%s4 + $0xc] sm:$0xf]
  %v657 = vld [vmem:[%s4 + $0x10] sm:$0xf]
  %v658 = vld [vmem:[%s4 + $0x14] sm:$0xf]
  %v659 = vld [vmem:[%s4 + $0x18] sm:$0xf]
  %v660 = vld [vmem:[%s4 + $0x1c] sm:$0xf]
  %s661 = scalar_lea.vmem %s2, 64
  %v662 = vld [vmem:[%s661] sm:$0xff]
  %v663 = vld [vmem:[%s661 + $0x8] sm:$0xff]
  %v664 = vld [vmem:[%s661 + $0x10] sm:$0xff]
  %v665 = vld [vmem:[%s661 + $0x18] sm:$0xff]
  %v666 = vld [vmem:[%s661 + $0x20] sm:$0xff]
  %v667 = vld [vmem:[%s661 + $0x28] sm:$0xff]
  %v668 = vld [vmem:[%s661 + $0x30] sm:$0xff]
  %v669 = vld [vmem:[%s661 + $0x38] sm:$0xff]
  %671 = vset.pattern.permute.xlu0 0
  %672 = vperm.xlu0 %671, %v662
  %v673 = vpop.permute.xlu0 %672
  %676 = vset.pattern.permute.xlu0 0
  %677 = vperm.xlu0 %676, %v663
  %v678 = vpop.permute.xlu0 %677
  %681 = vset.pattern.permute.xlu0 0
  %682 = vperm.xlu0 %681, %v664
  %v683 = vpop.permute.xlu0 %682
  %686 = vset.pattern.permute.xlu0 0
  %687 = vperm.xlu0 %686, %v665
  %v688 = vpop.permute.xlu0 %687
  %691 = vset.pattern.permute.xlu0 0
  %692 = vperm.xlu0 %691, %v666
  %v693 = vpop.permute.xlu0 %692
  %696 = vset.pattern.permute.xlu0 0
  %697 = vperm.xlu0 %696, %v667
  %v698 = vpop.permute.xlu0 %697
  %701 = vset.pattern.permute.xlu0 0
  %702 = vperm.xlu0 %701, %v668
  %v703 = vpop.permute.xlu0 %702
  %706 = vset.pattern.permute.xlu0 0
  %707 = vperm.xlu0 %706, %v669
  %v708 = vpop.permute.xlu0 %707
  %v718 = vunpack.c.l.b16 %v653
  %v719 = vunpack.c.l.b16 %v654
  %v720 = vunpack.c.l.b16 %v655
  %v721 = vunpack.c.l.b16 %v656
  %v722 = vunpack.c.l.b16 %v657
  %v723 = vunpack.c.l.b16 %v658
  %v724 = vunpack.c.l.b16 %v659
  %v725 = vunpack.c.l.b16 %v660
  %v726 = vpack.c.b16 %v719, %v718
  %v727 = vpack.c.b16 %v721, %v720
  %v728 = vpack.c.b16 %v723, %v722
  %v729 = vpack.c.b16 %v725, %v724
  %v731 = vsel %vm242, %v726, 0
  %v734 = vsel %vm242, %v727, 0
  %v737 = vsel %vm242, %v728, 0
  %v740 = vsel %vm242, %v729, 0
  %v743 = vsel %vm255, %v651, 0
  %v746 = vsel %vm255, %v652, 0
  %748 = vmatprep.subr.bf16.mxu0 %v746
  %749 = vmatpush1.bf16.msra.mxu0 %v743
  %750 = vmatprep.subr.bf16.mxu0 0
  %751 = vmatpush1.bf16.msra.mxu0 0
  %752 = vmatprep.subr.bf16.mxu0 0
  %753 = vmatpush1.bf16.msra.mxu0 0
  %754 = vmatprep.subr.bf16.mxu0 0
  %755 = vmatpush1.bf16.msra.mxu0 0
  %756 = vmatprep.subr.bf16.mxu0 0
  %757 = vmatpush1.bf16.msra.mxu0 0
  %758 = vmatprep.subr.bf16.mxu0 0
  %759 = vmatpush1.bf16.msra.mxu0 0
  %760 = vmatprep.subr.bf16.mxu0 0
  %761 = vmatpush1.bf16.msra.mxu0 0
  %762 = vmatprep.subr.bf16.mxu0 0
  %763 = vmatpush1.bf16.msra.mxu0 0
  %764 = vmatprep.subr.bf16.mxu0 0
  %765 = vmatpush1.bf16.msra.mxu0 0
  %766 = vmatprep.subr.bf16.mxu0 0
  %767 = vmatpush1.bf16.msra.mxu0 0
  %768 = vmatprep.subr.bf16.mxu0 0
  %769 = vmatpush1.bf16.msra.mxu0 0
  %770 = vmatprep.subr.bf16.mxu0 0
  %771 = vmatpush1.bf16.msra.mxu0 0
  %772 = vmatprep.subr.bf16.mxu0 0
  %773 = vmatpush1.bf16.msra.mxu0 0
  %774 = vmatprep.subr.bf16.mxu0 0
  %775 = vmatpush1.bf16.msra.mxu0 0
  %776 = vmatprep.subr.bf16.mxu0 0
  %777 = vmatpush1.bf16.msra.mxu0 0
  %778 = vmatprep.subr.bf16.mxu0 0
  %779 = vmatpush1.bf16.msra.mxu0 0
  %780 = vmatprep.mubr.bf16.mxu0 0
  %781 = vmatmul.mubr.bf16.gmra.mrb[0].mxu0 %v731
  %v782 = vpop.f32.mrb[0].mxu0
  %v783 = vadd.f32 %v673, %v782
  %v784 = vpop.f32.mrb[0].mxu0
  %v785 = vadd.f32 %v673, %v784
  %v786 = vpop.f32.mrb[0].mxu0
  %v787 = vadd.f32 %v678, %v786
  %v788 = vpop.f32.mrb[0].mxu0
  %v789 = vadd.f32 %v678, %v788
  %790 = vmatprep.mubr.bf16.mxu0 0
  %791 = vmatmul.mubr.bf16.gmra.mrb[0].mxu0 %v734
  %v792 = vpop.f32.mrb[0].mxu0
  %v793 = vadd.f32 %v683, %v792
  %v794 = vpop.f32.mrb[0].mxu0
  %v795 = vadd.f32 %v683, %v794
  %v796 = vpop.f32.mrb[0].mxu0
  %v797 = vadd.f32 %v688, %v796
  %v798 = vpop.f32.mrb[0].mxu0
  %v799 = vadd.f32 %v688, %v798
  %800 = vmatprep.mubr.bf16.mxu0 0
  %801 = vmatmul.mubr.bf16.gmra.mrb[0].mxu0 %v737
  %v802 = vpop.f32.mrb[0].mxu0
  %v803 = vadd.f32 %v693, %v802
  %v804 = vpop.f32.mrb[0].mxu0
  %v805 = vadd.f32 %v693, %v804
  %v806 = vpop.f32.mrb[0].mxu0
  %v807 = vadd.f32 %v698, %v806
  %v808 = vpop.f32.mrb[0].mxu0
  %v809 = vadd.f32 %v698, %v808
  %810 = vmatprep.mubr.bf16.mxu0 0
  %811 = vmatmul.mubr.bf16.gmra.mrb[0].mxu0 %v740
  %v812 = vpop.f32.mrb[0].mxu0
  %v813 = vadd.f32 %v703, %v812
  %v814 = vpop.f32.mrb[0].mxu0
  %v815 = vadd.f32 %v703, %v814
  %v816 = vpop.f32.mrb[0].mxu0
  %v817 = vadd.f32 %v708, %v816
  %v818 = vpop.f32.mrb[0].mxu0
  %v819 = vadd.f32 %v708, %v818
  %820 = vdwg.mxu0
  %v821 = vpack.c.bf16 %v787, %v783
  %v822 = vpack.c.bf16 %v789, %v785
  %v823 = vpack.c.bf16 %v797, %v793
  %v824 = vpack.c.bf16 %v799, %v795
  %v825 = vpack.c.bf16 %v807, %v803
  %v826 = vpack.c.bf16 %v809, %v805
  %v827 = vpack.c.bf16 %v817, %v813
  %v828 = vpack.c.bf16 %v819, %v815
  %v830 = vrot.slane %v101, 4
  %v832 = vsel %vm343, %v830, 0
  %834 = vmatprep.subr.bf16.mxu0 %v822
  %835 = vmatpush1.bf16.msra.mxu0 %v821
  %836 = vmatprep.subr.bf16.mxu0 %v824
  %837 = vmatpush1.bf16.msra.mxu0 %v823
  %838 = vmatprep.subr.bf16.mxu0 %v826
  %839 = vmatpush1.bf16.msra.mxu0 %v825
  %840 = vmatprep.subr.bf16.mxu0 %v828
  %841 = vmatpush1.bf16.msra.mxu0 %v827
  %842 = vmatprep.subr.bf16.mxu0 0
  %843 = vmatpush1.bf16.msra.mxu0 0
  %844 = vmatprep.subr.bf16.mxu0 0
  %845 = vmatpush1.bf16.msra.mxu0 0
  %846 = vmatprep.subr.bf16.mxu0 0
  %847 = vmatpush1.bf16.msra.mxu0 0
  %848 = vmatprep.subr.bf16.mxu0 0
  %849 = vmatpush1.bf16.msra.mxu0 0
  %850 = vmatprep.subr.bf16.mxu0 0
  %851 = vmatpush1.bf16.msra.mxu0 0
  %852 = vmatprep.subr.bf16.mxu0 0
  %853 = vmatpush1.bf16.msra.mxu0 0
  %854 = vmatprep.subr.bf16.mxu0 0
  %855 = vmatpush1.bf16.msra.mxu0 0
  %856 = vmatprep.subr.bf16.mxu0 0
  %857 = vmatpush1.bf16.msra.mxu0 0
  %858 = vmatprep.subr.bf16.mxu0 0
  %859 = vmatpush1.bf16.msra.mxu0 0
  %860 = vmatprep.subr.bf16.mxu0 0
  %861 = vmatpush1.bf16.msra.mxu0 0
  %862 = vmatprep.subr.bf16.mxu0 0
  %863 = vmatpush1.bf16.msra.mxu0 0
  %864 = vmatprep.subr.bf16.mxu0 0
  %865 = vmatpush1.bf16.msra.mxu0 0
  %866 = vmatprep.mubr.bf16.mxu0 0
  %867 = vmatmul.mubr.bf16.gmra.mrb[0].mxu0 %v832
  %v868 = vpop.f32.mrb[0].mxu0
  %v869 = vadd.f32 0.0, %v868
  %v870 = vpop.f32.mrb[0].mxu0
  %v871 = vadd.f32 0.0, %v870
  %v872 = vpop.f32.mrb[0].mxu0
  %v873 = vpop.f32.mrb[0].mxu0
  %874 = vdwg.mxu0
  %v875 = vrot.slane %v869, 4
  %v876 = vmax.f32 %v869, %v875
  %v877 = vrot.slane %v876, 2
  %v878 = vmax.f32 %v876, %v877
  %v879 = vrot.slane %v878, 1
  %v880 = vmax.f32 %v878, %v879
  %v881 = vrot.slane %v871, 4
  %v882 = vmax.f32 %v871, %v881
  %v883 = vrot.slane %v882, 2
  %v884 = vmax.f32 %v882, %v883
  %v885 = vrot.slane %v884, 1
  %v886 = vmax.f32 %v884, %v885
  %v887 = vsub.f32 %v869, %v880
  %v888 = vsub.f32 %v871, %v886
  %v889 = vmul.f32 %v887, 1.442695
  %v890 = vpow.pop %v889
  %v891 = vmul.f32 %v888, 1.442695
  %v892 = vpow.pop %v891
  %v893 = vrot.slane %v890, 4
  %v894 = vadd.f32 %v890, %v893
  %v895 = vrot.slane %v894, 2
  %v896 = vadd.f32 %v894, %v895
  %v897 = vrot.slane %v896, 1
  %v898 = vadd.f32 %v896, %v897
  %v899 = vrot.slane %v892, 4
  %v900 = vadd.f32 %v892, %v899
  %v901 = vrot.slane %v900, 2
  %v902 = vadd.f32 %v900, %v901
  %v903 = vrot.slane %v902, 1
  %v904 = vadd.f32 %v902, %v903
  %v905 = vrcp.pop %v898
  %v906 = vrcp.pop %v904
  %v907 = vmul.f32 %v890, %v905
  %v908 = vmul.f32 %v892, %v906
  %v909 = vpack.c.bf16 %v907, %v907
  %v910 = vpack.c.bf16 %v908, %v908
  %v912 = vrot.slane %v159, 4
  %914 = vxpose.xlu0.c.b16.start [1/8] %v912, 128
  %915 = vxpose.xlu0.c.b16.cont [2/8] 0, 128
  %916 = vxpose.xlu0.c.b16.cont [3/8] 0, 128
  %917 = vxpose.xlu0.c.b16.cont [4/8] 0, 128
  %918 = vxpose.xlu0.c.b16.cont [5/8] 0, 128
  %919 = vxpose.xlu0.c.b16.cont [6/8] 0, 128
  %920 = vxpose.xlu0.c.b16.cont [7/8] 0, 128
  %921 = vxpose.xlu0.c.b16.end [8/8] 0, 128
  %v922 = vpop.trf.xlu0
  %v923 = vpop.trf.xlu0
  %v924 = vpop.trf.xlu0
  %v925 = vpop.trf.xlu0
  %v926 = vpop.trf.xlu0
  %v927 = vpop.trf.xlu0
  %v928 = vpop.trf.xlu0
  %v929 = vpop.trf.xlu0
  %v931 = vsel %vm440, %v922, 0
  %v934 = vsel %vm440, %v923, 0
  %v937 = vsel %vm440, %v924, 0
  %v940 = vsel %vm440, %v925, 0
  %v943 = vsel %vm453, %v909, 0
  %v946 = vsel %vm453, %v910, 0
  %948 = vmatprep.subr.bf16.mxu0 %v946
  %949 = vmatpush1.bf16.msra.mxu0 %v943
  %950 = vmatprep.subr.bf16.mxu0 0
  %951 = vmatpush1.bf16.msra.mxu0 0
  %952 = vmatprep.subr.bf16.mxu0 0
  %953 = vmatpush1.bf16.msra.mxu0 0
  %954 = vmatprep.subr.bf16.mxu0 0
  %955 = vmatpush1.bf16.msra.mxu0 0
  %956 = vmatprep.subr.bf16.mxu0 0
  %957 = vmatpush1.bf16.msra.mxu0 0
  %958 = vmatprep.subr.bf16.mxu0 0
  %959 = vmatpush1.bf16.msra.mxu0 0
  %960 = vmatprep.subr.bf16.mxu0 0
  %961 = vmatpush1.bf16.msra.mxu0 0
  %962 = vmatprep.subr.bf16.mxu0 0
  %963 = vmatpush1.bf16.msra.mxu0 0
  %964 = vmatprep.subr.bf16.mxu0 0
  %965 = vmatpush1.bf16.msra.mxu0 0
  %966 = vmatprep.subr.bf16.mxu0 0
  %967 = vmatpush1.bf16.msra.mxu0 0
  %968 = vmatprep.subr.bf16.mxu0 0
  %969 = vmatpush1.bf16.msra.mxu0 0
  %970 = vmatprep.subr.bf16.mxu0 0
  %971 = vmatpush1.bf16.msra.mxu0 0
  %972 = vmatprep.subr.bf16.mxu0 0
  %973 = vmatpush1.bf16.msra.mxu0 0
  %974 = vmatprep.subr.bf16.mxu0 0
  %975 = vmatpush1.bf16.msra.mxu0 0
  %976 = vmatprep.subr.bf16.mxu0 0
  %977 = vmatpush1.bf16.msra.mxu0 0
  %978 = vmatprep.subr.bf16.mxu0 0
  %979 = vmatpush1.bf16.msra.mxu0 0
  %980 = vmatprep.mubr.bf16.mxu0 0
  %981 = vmatmul.mubr.bf16.gmra.mrb[0].mxu0 %v931
  %v982 = vpop.f32.mrb[0].mxu0
  %v983 = vadd.f32 0.0, %v982
  %v984 = vpop.f32.mrb[0].mxu0
  %v985 = vadd.f32 0.0, %v984
  %v986 = vpop.f32.mrb[0].mxu0
  %v987 = vadd.f32 0.0, %v986
  %v988 = vpop.f32.mrb[0].mxu0
  %v989 = vadd.f32 0.0, %v988
  %990 = vmatprep.mubr.bf16.mxu0 0
  %991 = vmatmul.mubr.bf16.gmra.mrb[0].mxu0 %v934
  %v992 = vpop.f32.mrb[0].mxu0
  %v993 = vadd.f32 0.0, %v992
  %v994 = vpop.f32.mrb[0].mxu0
  %v995 = vadd.f32 0.0, %v994
  %v996 = vpop.f32.mrb[0].mxu0
  %v997 = vadd.f32 0.0, %v996
  %v998 = vpop.f32.mrb[0].mxu0
  %v999 = vadd.f32 0.0, %v998
  %1000 = vmatprep.mubr.bf16.mxu0 0
  %1001 = vmatmul.mubr.bf16.gmra.mrb[0].mxu0 %v937
  %v1002 = vpop.f32.mrb[0].mxu0
  %v1003 = vadd.f32 0.0, %v1002
  %v1004 = vpop.f32.mrb[0].mxu0
  %v1005 = vadd.f32 0.0, %v1004
  %v1006 = vpop.f32.mrb[0].mxu0
  %v1007 = vadd.f32 0.0, %v1006
  %v1008 = vpop.f32.mrb[0].mxu0
  %v1009 = vadd.f32 0.0, %v1008
  %1010 = vmatprep.mubr.bf16.mxu0 0
  %1011 = vmatmul.mubr.bf16.gmra.mrb[0].mxu0 %v940
  %v1012 = vpop.f32.mrb[0].mxu0
  %v1013 = vadd.f32 0.0, %v1012
  %v1014 = vpop.f32.mrb[0].mxu0
  %v1015 = vadd.f32 0.0, %v1014
  %v1016 = vpop.f32.mrb[0].mxu0
  %v1017 = vadd.f32 0.0, %v1016
  %v1018 = vpop.f32.mrb[0].mxu0
  %v1019 = vadd.f32 0.0, %v1018
  %1020 = vdwg.mxu0
  %v1021 = vld [vmem:[%s8] sm:$0x3]
  %v1022 = vld [vmem:[%s7] sm:$0x3]
  %v1023 = vpack.c.bf16 %v987, %v983
  %v1024 = vpack.c.bf16 %v989, %v985
  %v1025 = vpack.c.bf16 %v997, %v993
  %v1026 = vpack.c.bf16 %v999, %v995
  %v1027 = vpack.c.bf16 %v1007, %v1003
  %v1028 = vpack.c.bf16 %v1009, %v1005
  %v1029 = vpack.c.bf16 %v1017, %v1013
  %v1030 = vpack.c.bf16 %v1019, %v1015
  %v1032 = vsel %vm343, %v1022, 0
  %1034 = vmatprep.subr.bf16.mxu0 %v1024
  %1035 = vmatpush1.bf16.msra.mxu0 %v1023
  %1036 = vmatprep.subr.bf16.mxu0 %v1026
  %1037 = vmatpush1.bf16.msra.mxu0 %v1025
  %1038 = vmatprep.subr.bf16.mxu0 %v1028
  %1039 = vmatpush1.bf16.msra.mxu0 %v1027
  %1040 = vmatprep.subr.bf16.mxu0 %v1030
  %1041 = vmatpush1.bf16.msra.mxu0 %v1029
  %1042 = vmatprep.subr.bf16.mxu0 0
  %1043 = vmatpush1.bf16.msra.mxu0 0
  %1044 = vmatprep.subr.bf16.mxu0 0
  %1045 = vmatpush1.bf16.msra.mxu0 0
  %1046 = vmatprep.subr.bf16.mxu0 0
  %1047 = vmatpush1.bf16.msra.mxu0 0
  %1048 = vmatprep.subr.bf16.mxu0 0
  %1049 = vmatpush1.bf16.msra.mxu0 0
  %1050 = vmatprep.subr.bf16.mxu0 0
  %1051 = vmatpush1.bf16.msra.mxu0 0
  %1052 = vmatprep.subr.bf16.mxu0 0
  %1053 = vmatpush1.bf16.msra.mxu0 0
  %1054 = vmatprep.subr.bf16.mxu0 0
  %1055 = vmatpush1.bf16.msra.mxu0 0
  %1056 = vmatprep.subr.bf16.mxu0 0
  %1057 = vmatpush1.bf16.msra.mxu0 0
  %1058 = vmatprep.subr.bf16.mxu0 0
  %1059 = vmatpush1.bf16.msra.mxu0 0
  %1060 = vmatprep.subr.bf16.mxu0 0
  %1061 = vmatpush1.bf16.msra.mxu0 0
  %1062 = vmatprep.subr.bf16.mxu0 0
  %1063 = vmatpush1.bf16.msra.mxu0 0
  %1064 = vmatprep.subr.bf16.mxu0 0
  %1065 = vmatpush1.bf16.msra.mxu0 0
  %1066 = vmatprep.mubr.bf16.mxu0 0
  %1067 = vmatmul.mubr.bf16.gmra.mrb[0].mxu0 %v1032
  %v1068 = vpop.f32.mrb[0].mxu0
  %v1069 = vadd.f32 0.0, %v1068
  %v1070 = vpop.f32.mrb[0].mxu0
  %v1071 = vadd.f32 0.0, %v1070
  %v1072 = vpop.f32.mrb[0].mxu0
  %v1073 = vpop.f32.mrb[0].mxu0
  %1074 = vdwg.mxu0
  %v1076 = vsel %vm242, %v1021, 0
  %1078 = vmatprep.subr.bf16.mxu0 %v746
  %1079 = vmatpush1.bf16.msra.mxu0 %v743
  %1080 = vmatprep.subr.bf16.mxu0 0
  %1081 = vmatpush1.bf16.msra.mxu0 0
  %1082 = vmatprep.subr.bf16.mxu0 0
  %1083 = vmatpush1.bf16.msra.mxu0 0
  %1084 = vmatprep.subr.bf16.mxu0 0
  %1085 = vmatpush1.bf16.msra.mxu0 0
  %1086 = vmatprep.subr.bf16.mxu0 0
  %1087 = vmatpush1.bf16.msra.mxu0 0
  %1088 = vmatprep.subr.bf16.mxu0 0
  %1089 = vmatpush1.bf16.msra.mxu0 0
  %1090 = vmatprep.subr.bf16.mxu0 0
  %1091 = vmatpush1.bf16.msra.mxu0 0
  %1092 = vmatprep.subr.bf16.mxu0 0
  %1093 = vmatpush1.bf16.msra.mxu0 0
  %1094 = vmatprep.subr.bf16.mxu0 0
  %1095 = vmatpush1.bf16.msra.mxu0 0
  %1096 = vmatprep.subr.bf16.mxu0 0
  %1097 = vmatpush1.bf16.msra.mxu0 0
  %1098 = vmatprep.subr.bf16.mxu0 0
  %1099 = vmatpush1.bf16.msra.mxu0 0
  %1100 = vmatprep.subr.bf16.mxu0 0
  %1101 = vmatpush1.bf16.msra.mxu0 0
  %1102 = vmatprep.subr.bf16.mxu0 0
  %1103 = vmatpush1.bf16.msra.mxu0 0
  %1104 = vmatprep.subr.bf16.mxu0 0
  %1105 = vmatpush1.bf16.msra.mxu0 0
  %1106 = vmatprep.subr.bf16.mxu0 0
  %1107 = vmatpush1.bf16.msra.mxu0 0
  %1108 = vmatprep.subr.bf16.mxu0 0
  %1109 = vmatpush1.bf16.msra.mxu0 0
  %1110 = vmatprep.mubr.bf16.mxu0 0
  %1111 = vmatmul.mubr.bf16.gmra.mrb[0].mxu0 %v1076
  %v1112 = vpop.f32.mrb[0].mxu0
  %v1113 = vadd.f32 %v1069, %v1112
  %v1114 = vpop.f32.mrb[0].mxu0
  %v1115 = vadd.f32 %v1071, %v1114
  %v1116 = vpop.f32.mrb[0].mxu0
  %v1117 = vpop.f32.mrb[0].mxu0
  %1118 = vdwg.mxu0
  %s1119 = scalar_lea.vmem %s3, 4
  %v1120 = vld [vmem:[%s1119] sm:$0xf]
  %1122 = vset.pattern.permute.xlu0 0
  %1123 = vperm.xlu0 %1122, %v1120
  %v1124 = vpop.permute.xlu0 %1123
  %v1126 = vadd.f32 %v1113, %v1124
  %v1127 = vadd.f32 %v1115, %v1124
  %v1128 = vadd.f32 %v1126, %v647
  %v1129 = vadd.f32 %v1127, %v649
  %v1132 = vcombine.low %v1128, %v1129
  %s1134 = scalar_lea.vmem %s9, 8
  %1135 = vst [vmem:[%s1134] sm:$0xff] %v1132
  // Predicated region
  $region38: #{_forward_crossattn.1} parent=0 // pred_check
    _
  $region39: #{_forward_crossattn.1} parent=0 // pred_check_branch
    %1137 = sbr.rel (0) target = $region41
  $region40: #{_forward_crossattn.1} parent=0 // pred_region
    _
  $region41: #{_forward_crossattn.1} parent=0 // pred_fallthru
    _
  // Predicated region
  $region42: #{_forward_crossattn.1} parent=0 // pred_check
    _
  $region43: #{_forward_crossattn.1} parent=0 // pred_check_branch
    %1139 = sbr.rel (0) target = $region45
  $region44: #{_forward_crossattn.1} parent=0 // pred_region
    _
  $region45: #{_forward_crossattn.1} parent=0 // pred_fallthru
    _

</llo_original>
